<compile_context>
chip_gen: v7x
topology: tpu7x:2x2x1
jax: 0.10.0
libtpu: 0.0.40
codegen_flags: <defaults>
</compile_context>

<pallas_src>
import jax
import jax.numpy as jnp
import numpy as np
from jax.experimental import pallas as pl
from jax.experimental.pallas import tpu as pltpu


def _round_up(n, m):
    return ((n + m - 1) // m) * m


def _tpu_generation():
    """Best-effort TPU generation detection: returns 5, 6, 7 or None."""
    try:
        kind = jax.devices()[0].device_kind.lower()
    except Exception:
        return None
    if "v7" in kind or "7x" in kind:
        return 7
    if "v6" in kind:
        return 6
    if "v5" in kind:
        return 5
    return None


def _h_swish_kernel(x_ref, o_ref):
    x = x_ref[...]
    # h_sigmoid(x) = relu6(x + 3) / 6 ; relu6(z) = clip(z, 0, 6)
    hsig = jnp.clip(x + 3.0, 0.0, 6.0) / 6.0
    o_ref[...] = (x * hsig).astype(o_ref.dtype)


def h_swish(x):
    """Apply hard-swish elementwise to an arbitrary-shape tensor via Pallas."""
    orig_shape = x.shape
    orig_dtype = x.dtype
    total = int(np.prod(orig_shape))
    itemsize = jnp.dtype(orig_dtype).itemsize

    # ---- lane-dense slab geometry; avoid padding whenever possible --------
    lanes = None
    for cand in (1024, 512, 256, 128):
        if total % cand == 0:
            lanes = cand
            break
    if lanes is None:
        lanes = 128  # rare path: tiny / non-128-divisible sizes need padding

    rows = pl.cdiv(total, lanes)
    needs_pad = rows * lanes != total

    flat = x.reshape(-1)
    if needs_pad:
        flat = jnp.pad(flat, (0, rows * lanes - total))
    x2d = flat.reshape(rows, lanes)

    # ---- generation-aware tile sizing (constant tile *bytes* per dtype) ---
    gen = _tpu_generation()
    if gen == 7:
        tile_bytes = 8 << 20   # 32 MiB total with in/out double-buffering
    elif gen == 6:
        tile_bytes = 4 << 20   # 16 MiB total, under 32 MiB default scoped VMEM
    else:
        tile_bytes = 2 << 20   # v5e / unknown: 8 MiB total, under 16 MiB default

    tile_rows = max(8, (tile_bytes // (lanes * itemsize)) // 8 * 8)
    if tile_rows >= rows:
        tile_rows = rows       # single full block (always layout-legal)
    grid_rows = pl.cdiv(rows, tile_rows)

    # v7x has 2 TensorCores: prefer an even grid so the parallel axis splits
    # 50/50.  Skip entirely on single-TC chips (v5e/v6e) and tiny inputs.
    if gen == 7 and rows >= 16 and grid_rows % 2 == 1:
        target_grid = grid_rows + 1
        cand = max(8, _round_up(pl.cdiv(rows, target_grid), 8))
        if cand < rows and pl.cdiv(rows, cand) % 2 == 0:
            tile_rows = cand
            grid_rows = pl.cdiv(rows, cand)

    cp_kwargs = dict(dimension_semantics=("parallel",))
    if gen == 7:
        # 8 MiB tiles x 2 arrays x 2 buffers = 32 MiB > 32 MiB default scoped
        # limit on v7x -> raise it (physical per-TC VMEM is 64 MiB).
        cp_kwargs["vmem_limit_bytes"] = 48 << 20

    out = pl.pallas_call(
        _h_swish_kernel,
        out_shape=jax.ShapeDtypeStruct((rows, lanes), orig_dtype),
        grid=(grid_rows,),
        in_specs=[pl.BlockSpec((tile_rows, lanes), lambda i: (i, 0))],
        out_specs=pl.BlockSpec((tile_rows, lanes), lambda i: (i, 0)),
        compiler_params=pltpu.CompilerParams(**cp_kwargs),
        cost_estimate=pl.CostEstimate(
            flops=5 * total,
            transcendentals=0,
            bytes_accessed=2 * total * itemsize,
        ),
    )(x2d)

    flat_out = out.reshape(-1)
    if needs_pad:
        flat_out = flat_out[:total]
    return flat_out.reshape(orig_shape)


def _h_swish_ref(x):
    return x * jnp.clip(x + 3.0, 0.0, 6.0) / 6.0


if __name__ == "__main__":
    key = jax.random.PRNGKey(0)
    # NCHW input, matching the PyTorch module's conv-style layout.
    x = jax.random.normal(key, (2, 4, 16, 16), dtype=jnp.float32) * 4.0

    y = jax.block_until_ready(h_swish(x))

    y_ref = _h_swish_ref(x)
    assert y.shape == x.shape and y.dtype == x.dtype
    assert float(jnp.max(jnp.abs(y - y_ref))) < 1e-5

    print("KERNEL_OK")
</pallas_src>

<mosaic_0001>
module attributes {stable_mosaic.version = 11 : i64} {
  func.func @_h_swish_kernel(%arg0: i32, %arg1: memref<2x1024xf32, #tpu.memory_space<vmem>>, %arg2: memref<2x1024xf32, #tpu.memory_space<vmem>>) attributes {dimension_semantics = [#tpu.dimension_semantics<parallel>], iteration_bounds = array<i64: 1>, scalar_prefetch = 0 : i64, scratch_operands = 0 : i64, tpu.core_type = #tpu.core_type<tc>, window_params = [{transform_indices = @transform_0, window_bounds = array<i64: 2, 1024>}, {transform_indices = @transform_1, window_bounds = array<i64: 2, 1024>}]} {
    %c0 = arith.constant 0 : index
    %c0_0 = arith.constant 0 : index
    %0 = vector.load %arg1[%c0, %c0_0] : memref<2x1024xf32, #tpu.memory_space<vmem>>, vector<2x1024xf32>
    %cst = arith.constant 3.000000e+00 : f32
    %1 = vector.broadcast %cst : f32 to vector<2x1024xf32>
    %2 = arith.addf %0, %1 : vector<2x1024xf32>
    %cst_1 = arith.constant 0.000000e+00 : f32
    %cst_2 = arith.constant 6.000000e+00 : f32
    %3 = vector.broadcast %cst_1 : f32 to vector<2x1024xf32>
    %4 = arith.maximumf %3, %2 : vector<2x1024xf32>
    %5 = vector.broadcast %cst_2 : f32 to vector<2x1024xf32>
    %6 = arith.minimumf %5, %4 : vector<2x1024xf32>
    %cst_3 = arith.constant 6.000000e+00 : f32
    %7 = vector.broadcast %cst_3 : f32 to vector<2x1024xf32>
    %8 = arith.divf %6, %7 : vector<2x1024xf32>
    %9 = arith.mulf %0, %8 : vector<2x1024xf32>
    %c0_4 = arith.constant 0 : index
    %c0_5 = arith.constant 0 : index
    %10 = vector.load %arg2[%c0_4, %c0_5] : memref<2x1024xf32, #tpu.memory_space<vmem>>, vector<2x1024xf32>
    tpu.vector_store %arg2[%c0_4, %c0_5], %9 {strides = array<i32>} : memref<2x1024xf32, #tpu.memory_space<vmem>>, vector<2x1024xf32>,
    return
  }
  func.func @transform_0(%arg0: i32) -> (i32, i32) {
    %c0_i32 = arith.constant 0 : i32
    %c0_i32_0 = arith.constant 0 : i32
    return %arg0, %c0_i32 : i32, i32
  }
  func.func @transform_1(%arg0: i32) -> (i32, i32) {
    %c0_i32 = arith.constant 0 : i32
    %c0_i32_0 = arith.constant 0 : i32
    return %arg0, %c0_i32 : i32, i32
  }
}

</mosaic_0001>

<llo_original>
// kernel: tpu_custom_call.1
$region0: #{tpu_custom_call.1}
  #allocation0 [shape = 'u32[]', space=smem, size = 0x4, offset = 0x4, fixed_abs, tag = 'smem constant byte address 0x4 - core index']
  #allocation1 [shape = 'u32[144,128]{1,0:T(1,128)}', space=vmem, size = 0x12000, scoped, tag = 'internal scratch']
  %s0 = inlined_call_operand.hbm [shape: f32[2,1024], index: 0, kind: input, shape index: {}]
  %s1 = inlined_call_operand.hbm [shape: f32[2,1024], index: 1, kind: output, shape index: {}]
  %s2 = sld [smem:[#allocation0]]
  $region18: #{tpu_custom_call.1} parent=0
    _
  %s4 = ssub.s32 1, %s2
  %s5 = scalar_select 0, %s4, %s2
  $region1: #{tpu_custom_call.1} parent=0
    #allocation2 [shape = 'u8[8192]{0}', space=vmem, size = 0x2000, scoped, tag = 'input window, operand 0, single buffered']
    #allocation3 [shape = 's32[1]{0}', space=sflag, size = 0x4, scoped, tag = 'scoped memory for tpu_custom_call.1']
    #allocation4 [shape = 's32[1]{0}', space=sflag, size = 0x4, scoped, tag = 'scoped memory for tpu_custom_call.1']
    #allocation5 [shape = 'u8[8192]{0}', space=vmem, size = 0x2000, scoped, tag = 'output window, operand 0, single buffered']
    %6 = vsyncpa [#allocation3], 0
    %7 = vsyncpa [#allocation4], 0
    // Predicated region
    $region2: #{tpu_custom_call.1} parent=1 // pred_check
      _
    $region3: #{tpu_custom_call.1} parent=1 // pred_check_branch
      %9 = sbr.rel (0) target = $region5
    $region4: #{tpu_custom_call.1} parent=1 // pred_region
      %s11 = ssub.s32 256, 256
      %12 = vsyncadd [#allocation3], %s11
      %s14 = sshll.u32 [#allocation2], 4
      %s15 = int_to_ptr.vmem [resolvable:$true] %s14
      %17 = dma.hbm_to_vmem [thread:$0]  %s0, 256, %s15, [#allocation3]
    $region5: #{tpu_custom_call.1} parent=1 // pred_fallthru
      _
    // Predicated region
    $region6: #{tpu_custom_call.1} parent=1 // pred_check
      _
    $region7: #{tpu_custom_call.1} parent=1 // pred_check_branch
      %19 = sbr.rel (0) target = $region9
    $region8: #{tpu_custom_call.1} parent=1 // pred_region
      %20 = dma.done [#allocation3], 256
    $region9: #{tpu_custom_call.1} parent=1 // pred_fallthru
      _
    %v21 = vld [vmem:[#allocation2] sm:$0xff]
    %v22 = vld [vmem:[#allocation2 + $0x8] sm:$0xff]
    %v23 = vadd.f32 %v21, 3.0
    %v24 = vadd.f32 %v22, 3.0
    %v25 = vmax.f32 %v23, 0.0
    %v26 = vmax.f32 %v24, 0.0
    %v27 = vmin.f32 %v25, 6.0
    %v28 = vmin.f32 %v26, 6.0
    %v29 = vrcp.pop 6.0
    %v30 = vmul.f32 %v27, %v29
    %v31 = vmul.f32 %v28, %v29
    %v32 = vmul.f32 %v21, %v30
    %v33 = vmul.f32 %v22, %v31
    %34 = vst [vmem:[#allocation5] sm:$0xff] %v32
    %35 = vst [vmem:[#allocation5 + $0x8] sm:$0xff] %v33
    // Predicated region
    $region10: #{tpu_custom_call.1} parent=1 // pred_check
      _
    $region11: #{tpu_custom_call.1} parent=1 // pred_check_branch
      %37 = sbr.rel (0) target = $region13
    $region12: #{tpu_custom_call.1} parent=1 // pred_region
      %s39 = ssub.s32 256, 256
      %40 = vsyncadd [#allocation4], %s39
      %s42 = sshll.u32 [#allocation5], 4
      %s43 = int_to_ptr.vmem [resolvable:$true] %s42
      %45 = dma.vmem_to_hbm [thread:$0]  %s43, 256, %s1, [#allocation4]
    $region13: #{tpu_custom_call.1} parent=1 // pred_fallthru
      _
    // Predicated region
    $region14: #{tpu_custom_call.1} parent=1 // pred_check
      _
    $region15: #{tpu_custom_call.1} parent=1 // pred_check_branch
      %47 = sbr.rel (0) target = $region17
    $region16: #{tpu_custom_call.1} parent=1 // pred_region
      %48 = dma.done [#allocation4], 256
    $region17: #{tpu_custom_call.1} parent=1 // pred_fallthru
      _
    %49 = vsyncpa [#allocation3], 1
    %50 = vsyncpa [#allocation4], 1

</llo_original>
